<compile_context>
chip_gen: v7x
topology: tpu7x:2x2x1
jax: 0.10.0
libtpu: 0.0.40
codegen_flags: <defaults>
</compile_context>

<pallas_src>
import functools

import jax
import jax.numpy as jnp
from jax.experimental import pallas as pl
from jax.experimental.pallas import tpu as pltpu


def _round_up(x, m):
    return (x + m - 1) // m * m


def _largest_tile(n_pad128, prefs):
    """Largest preferred tile size that does not exceed the (128-padded) N."""
    for t in prefs:
        if t <= n_pad128:
            return t
    return prefs[-1]


def _vmem_limit_bytes():
    """~75% of the chip's VMEM, capped at 96 MiB (never push toward 128 MiB)."""
    cap = 64 * 1024 * 1024  # conservative fallback (v7x per-core VMEM)
    try:
        cap = int(pltpu.get_tpu_info().vmem_capacity_bytes)
    except Exception:
        pass
    return int(min((cap * 3) // 4, 96 * 1024 * 1024))


def _sage_agg_kernel(adj_ref, h_ref, root_ref, o_ref, *, apply_relu, tk, h_resident):
    """Accumulate adj_tile @ h over the contraction axis directly into o_ref;
    finalize with the root term (x @ W_r + b) and optional fused ReLU.

    adj_ref  : (TM, TK)            bf16 tile of normalized adjacency
    h_ref    : (Npad, Fpad) or (TK, Fpad)  bf16 pre-projected features (x @ W_l)
    root_ref : (TM, Fpad)          bf16 root term for this row tile
    o_ref    : (TM, Fpad)          f32  output rows (resident across k -> acc)
    """
    k = pl.program_id(1)

    @pl.when(k == 0)
    def _init():
        o_ref[...] = jnp.zeros_like(o_ref)

    if h_resident:
        start = pl.multiple_of(k * tk, tk)
        h_blk = h_ref[pl.ds(start, tk), :]
    else:
        h_blk = h_ref[...]

    o_ref[...] += jnp.dot(adj_ref[...], h_blk, preferred_element_type=jnp.float32)

    @pl.when(k == pl.num_programs(1) - 1)
    def _finish():
        out = o_ref[...] + root_ref[...].astype(jnp.float32)
        if apply_relu:
            out = jnp.maximum(out, 0.0)
        o_ref[...] = out


def sage_conv(x, adj_pad_bf16, w_l, w_r, b, *, n, tm, tk, apply_relu,
              vmem_limit_bytes):
    """One SAGEConv layer: out = (adj @ x) @ W_l + x @ W_r + b (+ ReLU)."""
    n_pad = adj_pad_bf16.shape[0]
    f_out = w_l.shape[1]
    f_pad = _round_up(f_out, 128)

    # Hoisted projections (plain XLA).
    h = jnp.dot(x, w_l)                      # (n, f_out)
    root = jnp.dot(x, w_r) + b[None, :]      # (n, f_out)

    # Zero-pad to (n_pad, f_pad); padded rows/cols contribute zeros.
    h_p = jnp.zeros((n_pad, f_pad), jnp.bfloat16)
    h_p = h_p.at[:n, :f_out].set(h.astype(jnp.bfloat16))
    root_p = jnp.zeros((n_pad, f_pad), jnp.bfloat16)
    root_p = root_p.at[:n, :f_out].set(root.astype(jnp.bfloat16))

    # VMEM budget: double-buffered adj tile + root tile + output tile,
    # plus (conservatively double-buffered) resident h if it fits.
    fixed = (2 * tm * tk * 2          # adj tiles (bf16)
             + 2 * tm * f_pad * 2     # root tiles (bf16)
             + 2 * tm * f_pad * 4)    # output tiles (f32)
    h_bytes = 2 * n_pad * f_pad * 2   # resident h (bf16, 2 buffers worst case)
    h_resident = (fixed + h_bytes) <= int(0.85 * vmem_limit_bytes)

    if h_resident:
        # Constant block index -> DMA'd exactly once, stays VMEM-resident.
        h_spec = pl.BlockSpec((n_pad, f_pad), lambda i, k: (0, 0))
    else:
        h_spec = pl.BlockSpec((tk, f_pad), lambda i, k: (k, 0))

    kernel = functools.partial(
        _sage_agg_kernel, apply_relu=apply_relu, tk=tk, h_resident=h_resident)

    out_p = pl.pallas_call(
        kernel,
        out_shape=jax.ShapeDtypeStruct((n_pad, f_pad), jnp.float32),
        grid_spec=pltpu.PrefetchScalarGridSpec(
            num_scalar_prefetch=0,
            grid=(n_pad // tm, n_pad // tk),
            in_specs=[
                pl.BlockSpec((tm, tk), lambda i, k: (i, k)),      # adj tile
                h_spec,                                           # h (resident/tiled)
                pl.BlockSpec((tm, f_pad), lambda i, k: (i, 0)),   # root rows
            ],
            out_specs=pl.BlockSpec((tm, f_pad), lambda i, k: (i, 0)),
        ),
        compiler_params=pltpu.CompilerParams(
            dimension_semantics=("parallel", "arbitrary"),
            vmem_limit_bytes=vmem_limit_bytes,
        ),
    )(adj_pad_bf16, h_p, root_p)

    return out_p[:n, :f_out]


def normalize_adj(adj):
    """deg^-1/2 * adj * deg^-1/2 (matches the reference preprocessing)."""
    deg = jnp.sum(adj, axis=1)
    deg_inv_sqrt = jnp.where(deg > 0, deg ** -0.5, 0.0)
    return deg_inv_sqrt[:, None] * adj * deg_inv_sqrt[None, :]


def init_sage_params(key, in_channels, hidden_channels, out_channels, num_layers):
    """Deterministic synthetic parameters for the SAGEConv stack."""
    dims = [in_channels] + [hidden_channels] * (num_layers - 1) + [out_channels]
    params = []
    for li in range(num_layers):
        f_in, f_out = dims[li], dims[li + 1]
        key, k1, k2 = jax.random.split(key, 3)
        scale = 1.0 / jnp.sqrt(jnp.float32(f_in))
        w_l = jax.random.normal(k1, (f_in, f_out), jnp.float32) * scale
        w_r = jax.random.normal(k2, (f_in, f_out), jnp.float32) * scale
        b = jnp.zeros((f_out,), jnp.float32)
        params.append((w_l, w_r, b))
    return params


def sage_forward(x, adj, params):
    """Stack of SAGEConv layers; ReLU fused into all but the last layer.

    Dropout is identity (eval mode / training=False).
    """
    # TODO(synk): F.dropout with training=True (stochastic masking) not emitted;
    # inference semantics (identity) implemented instead.
    n = x.shape[0]
    n_pad128 = _round_up(n, 128)

    # Pick large tiles first, then pad N up to the tile size so we never
    # silently degrade to 128x128 tiles.
    tm = _largest_tile(n_pad128, (512, 256, 128))          # row tile (parallel)
    tk = _largest_tile(n_pad128, (2048, 1024, 512, 256, 128))  # contraction tile
    n_pad = _round_up(n, max(tm, tk))
    # Keep >= 2 row tiles whenever possible (feed both v7x TensorCores).
    if n_pad // tm < 2 and n_pad >= 256:
        tm = min(n_pad // 2, 512)

    vmem_limit = _vmem_limit_bytes()

    # Pad + cast the N^2 adjacency once for the whole stack (dominant operand).
    adj_pad = jnp.zeros((n_pad, n_pad), jnp.bfloat16)
    adj_pad = adj_pad.at[:n, :n].set(adj.astype(jnp.bfloat16))

    n_layers = len(params)
    for li, (w_l, w_r, b) in enumerate(params):
        is_last = li == n_layers - 1
        x = sage_conv(
            x, adj_pad, w_l, w_r, b,
            n=n, tm=tm, tk=tk, apply_relu=not is_last,
            vmem_limit_bytes=vmem_limit,
        )
    return x


def sage_forward_ref(x, adj, params):
    """Pure-JAX f32 reference (same math, no Pallas, no bf16)."""
    n_layers = len(params)
    for li, (w_l, w_r, b) in enumerate(params):
        x = jnp.dot(adj, jnp.dot(x, w_l)) + jnp.dot(x, w_r) + b[None, :]
        if li != n_layers - 1:
            x = jnp.maximum(x, 0.0)
    return x


if __name__ == "__main__":
    # Small, deterministic example shapes.
    N = 128            # number of graph nodes
    IN_CH = 32
    HIDDEN = 32
    OUT_CH = 16
    NUM_LAYERS = 3

    key = jax.random.PRNGKey(0)
    kx, ka, kp = jax.random.split(key, 3)

    x = jax.random.normal(kx, (N, IN_CH), jnp.float32)

    # Random sparse-ish symmetric adjacency with self-loops (avoids zero degree).
    raw = (jax.random.uniform(ka, (N, N)) > 0.9).astype(jnp.float32)
    adj = jnp.maximum(raw, raw.T)
    adj = jnp.maximum(adj, jnp.eye(N, dtype=jnp.float32))
    adj = normalize_adj(adj)

    params = init_sage_params(kp, IN_CH, HIDDEN, OUT_CH, NUM_LAYERS)

    out = sage_forward(x, adj, params)
    out = jax.block_until_ready(out)

    assert out.shape == (N, OUT_CH)
    assert bool(jnp.all(jnp.isfinite(out)))

    # Loose tolerance vs f32 reference (adj/h travel as bf16 in the kernel).
    ref = sage_forward_ref(x, adj, params)
    err = float(jnp.max(jnp.abs(out - ref)))
    scale = float(jnp.max(jnp.abs(ref))) + 1e-6
    assert err <= 0.08 * scale, f"max abs err {err} vs scale {scale}"

    print("KERNEL_OK")
</pallas_src>

<mosaic_0001>
module attributes {stable_mosaic.version = 11 : i64} {
  func.func @_sage_agg_kernel(%arg0: i32, %arg1: i32, %arg2: memref<128x128xbf16, #tpu.memory_space<vmem>>, %arg3: memref<128x128xbf16, #tpu.memory_space<vmem>>, %arg4: memref<128x128xbf16, #tpu.memory_space<vmem>>, %arg5: memref<128x128xf32, #tpu.memory_space<vmem>>) attributes {dimension_semantics = [#tpu.dimension_semantics<parallel>, #tpu.dimension_semantics<arbitrary>], iteration_bounds = array<i64: 1, 1>, scalar_prefetch = 0 : i64, scratch_operands = 0 : i64, tpu.core_type = #tpu.core_type<tc>, window_params = [{transform_indices = @transform_0, window_bounds = array<i64: 128, 128>}, {pipeline_mode = #tpu.pipeline_mode<synchronous>, transform_indices = @transform_1, window_bounds = array<i64: 128, 128>}, {transform_indices = @transform_2, window_bounds = array<i64: 128, 128>}, {transform_indices = @transform_3, window_bounds = array<i64: 128, 128>}]} {
    %c0_i32 = arith.constant 0 : i32
    %0 = arith.cmpi eq, %arg1, %c0_i32 : i32
    %1 = arith.extui %0 : i1 to i32
    %c0_i32_0 = arith.constant 0 : i32
    %2 = arith.cmpi ne, %1, %c0_i32_0 : i32
    scf.if %2 {
      %cst_9 = arith.constant 0.000000e+00 : f32
      %15 = vector.broadcast %cst_9 : f32 to vector<128x128xf32>
      %c0_10 = arith.constant 0 : index
      %c0_11 = arith.constant 0 : index
      %16 = vector.load %arg5[%c0_10, %c0_11] : memref<128x128xf32, #tpu.memory_space<vmem>>, vector<128x128xf32>
      tpu.vector_store %arg5[%c0_10, %c0_11], %15 {strides = array<i32>} : memref<128x128xf32, #tpu.memory_space<vmem>>, vector<128x128xf32>,
    } else {
    }
    %c128_i32 = arith.constant 128 : i32
    %3 = arith.muli %arg1, %c128_i32 : i32
    %4 = tpu.assume_multiple %3, 128 : i32
    %5 = arith.index_cast %4 : i32 to index
    %c0 = arith.constant 0 : index
    %6 = vector.load %arg3[%5, %c0] : memref<128x128xbf16, #tpu.memory_space<vmem>>, vector<128x128xbf16>
    %c0_1 = arith.constant 0 : index
    %c0_2 = arith.constant 0 : index
    %7 = vector.load %arg5[%c0_1, %c0_2] : memref<128x128xf32, #tpu.memory_space<vmem>>, vector<128x128xf32>
    %c0_3 = arith.constant 0 : index
    %c0_4 = arith.constant 0 : index
    %8 = vector.load %arg2[%c0_3, %c0_4] : memref<128x128xbf16, #tpu.memory_space<vmem>>, vector<128x128xbf16>
    %cst = arith.constant dense<0.000000e+00> : vector<128x128xf32>
    %9 = tpu.matmul %8, %6, %cst {dimension_numbers = #tpu.dot_dimension_numbers<[1], [0], [0], [1], [0, 0, 1, 1], [], []>} : vector<128x128xbf16>, vector<128x128xbf16>, vector<128x128xf32> -> vector<128x128xf32>
    %10 = arith.addf %7, %9 : vector<128x128xf32>
    %c0_5 = arith.constant 0 : index
    %c0_6 = arith.constant 0 : index
    %11 = vector.load %arg5[%c0_5, %c0_6] : memref<128x128xf32, #tpu.memory_space<vmem>>, vector<128x128xf32>
    tpu.vector_store %arg5[%c0_5, %c0_6], %10 {strides = array<i32>} : memref<128x128xf32, #tpu.memory_space<vmem>>, vector<128x128xf32>,
    %c0_i32_7 = arith.constant 0 : i32
    %12 = arith.cmpi eq, %arg1, %c0_i32_7 : i32
    %13 = arith.extui %12 : i1 to i32
    %c0_i32_8 = arith.constant 0 : i32
    %14 = arith.cmpi ne, %13, %c0_i32_8 : i32
    scf.if %14 {
      %c0_9 = arith.constant 0 : index
      %c0_10 = arith.constant 0 : index
      %15 = vector.load %arg5[%c0_9, %c0_10] : memref<128x128xf32, #tpu.memory_space<vmem>>, vector<128x128xf32>
      %c0_11 = arith.constant 0 : index
      %c0_12 = arith.constant 0 : index
      %16 = vector.load %arg4[%c0_11, %c0_12] : memref<128x128xbf16, #tpu.memory_space<vmem>>, vector<128x128xbf16>
      %17 = arith.extf %16 : vector<128x128xbf16> to vector<128x128xf32>
      %18 = arith.addf %15, %17 : vector<128x128xf32>
      %cst_13 = arith.constant 0.000000e+00 : f32
      %19 = vector.broadcast %cst_13 : f32 to vector<128x128xf32>
      %20 = arith.maximumf %18, %19 : vector<128x128xf32>
      %c0_14 = arith.constant 0 : index
      %c0_15 = arith.constant 0 : index
      %21 = vector.load %arg5[%c0_14, %c0_15] : memref<128x128xf32, #tpu.memory_space<vmem>>, vector<128x128xf32>
      tpu.vector_store %arg5[%c0_14, %c0_15], %20 {strides = array<i32>} : memref<128x128xf32, #tpu.memory_space<vmem>>, vector<128x128xf32>,
    } else {
    }
    return
  }
  func.func @transform_0(%arg0: i32, %arg1: i32) -> (i32, i32) {
    %c0_i32 = arith.constant 0 : i32
    return %arg0, %arg1 : i32, i32
  }
  func.func @transform_1(%arg0: i32, %arg1: i32) -> (i32, i32) {
    %c0_i32 = arith.constant 0 : i32
    %c0_i32_0 = arith.constant 0 : i32
    %c0_i32_1 = arith.constant 0 : i32
    return %c0_i32, %c0_i32_0 : i32, i32
  }
  func.func @transform_2(%arg0: i32, %arg1: i32) -> (i32, i32) {
    %c0_i32 = arith.constant 0 : i32
    %c0_i32_0 = arith.constant 0 : i32
    return %arg0, %c0_i32 : i32, i32
  }
  func.func @transform_3(%arg0: i32, %arg1: i32) -> (i32, i32) {
    %c0_i32 = arith.constant 0 : i32
    %c0_i32_0 = arith.constant 0 : i32
    return %arg0, %c0_i32 : i32, i32
  }
}

</mosaic_0001>

<llo_original>
// kernel: tpu_custom_call.1
$region0: #{tpu_custom_call.1}
  #allocation0 [shape = 'u32[]', space=smem, size = 0x4, offset = 0x4, fixed_abs, tag = 'smem constant byte address 0x4 - core index']
  #allocation1 [shape = 'u32[144,128]{1,0:T(1,128)}', space=vmem, size = 0x12000, scoped, tag = 'internal scratch']
  %s0 = inlined_call_operand.hbm [shape: bf16[128,128], index: 0, kind: input, shape index: {}]
  %s1 = inlined_call_operand.hbm [shape: bf16[128,128], index: 1, kind: input, shape index: {}]
  %s2 = inlined_call_operand.hbm [shape: bf16[128,128], index: 2, kind: input, shape index: {}]
  %s3 = inlined_call_operand.hbm [shape: f32[128,128], index: 3, kind: output, shape index: {}]
  %s4 = sld [smem:[#allocation0]]
  $region42: #{tpu_custom_call.1} parent=0
    _
  %s6 = ssub.s32 1, %s4
  %s7 = scalar_select 0, %s6, %s4
  $region1: #{tpu_custom_call.1} parent=0
    #allocation2 [shape = 'u8[32768]{0}', space=vmem, size = 0x8000, scoped, tag = 'input window, operand 0, single buffered']
    #allocation3 [shape = 's32[1]{0}', space=sflag, size = 0x4, scoped, tag = 'scoped memory for tpu_custom_call.1']
    #allocation4 [shape = 's32[1]{0}', space=sflag, size = 0x4, scoped, tag = 'scoped memory for tpu_custom_call.1']
    #allocation5 [shape = 'u8[32768]{0}', space=vmem, size = 0x8000, scoped, tag = 'input window, operand 1, single buffered']
    #allocation6 [shape = 's32[1]{0}', space=sflag, size = 0x4, scoped, tag = 'scoped memory for tpu_custom_call.1']
    #allocation7 [shape = 'u8[32768]{0}', space=vmem, size = 0x8000, scoped, tag = 'input window, operand 2, single buffered']
    #allocation8 [shape = 'u8[65536]{0}', space=vmem, size = 0x10000, scoped, tag = 'output window, operand 0, single buffered']
    %8 = vsyncpa [#allocation3], 0
    %9 = vsyncpa [#allocation6], 0
    %10 = vsyncpa [#allocation4], 0
    // Predicated region
    $region2: #{tpu_custom_call.1} parent=1 // pred_check
      _
    $region3: #{tpu_custom_call.1} parent=1 // pred_check_branch
      %12 = sbr.rel (0) target = $region5
    $region4: #{tpu_custom_call.1} parent=1 // pred_region
      %s14 = ssub.s32 1024, 1024
      %15 = vsyncadd [#allocation3], %s14
      %s16 = sshll.u32 [#allocation2], 4
      %s17 = int_to_ptr.vmem [resolvable:$true] %s16
      %22 = dma.hbm_to_vmem [thread:$0]  %s0, 1024, %s17, [#allocation3], 64, 64, 4
    $region5: #{tpu_custom_call.1} parent=1 // pred_fallthru
      _
    // Predicated region
    $region6: #{tpu_custom_call.1} parent=1 // pred_check
      _
    $region7: #{tpu_custom_call.1} parent=1 // pred_check_branch
      %24 = sbr.rel (0) target = $region9
    $region8: #{tpu_custom_call.1} parent=1 // pred_region
      %s26 = ssub.s32 1024, 1024
      %27 = vsyncadd [#allocation6], %s26
      %s28 = sshll.u32 [#allocation5], 4
      %s29 = int_to_ptr.vmem [resolvable:$true] %s28
      %34 = dma.hbm_to_vmem [thread:$0]  %s1, 1024, %s29, [#allocation6], 64, 64, 4
    $region9: #{tpu_custom_call.1} parent=1 // pred_fallthru
      _
    // Predicated region
    $region10: #{tpu_custom_call.1} parent=1 // pred_check
      _
    $region11: #{tpu_custom_call.1} parent=1 // pred_check_branch
      %36 = sbr.rel (0) target = $region13
    $region12: #{tpu_custom_call.1} parent=1 // pred_region
      %s38 = ssub.s32 1024, 1024
      %39 = vsyncadd [#allocation6], %s38
      %s40 = sshll.u32 [#allocation7], 4
      %s41 = int_to_ptr.vmem [resolvable:$true] %s40
      %46 = dma.hbm_to_vmem [thread:$0]  %s2, 1024, %s41, [#allocation6], 64, 64, 4
    $region13: #{tpu_custom_call.1} parent=1 // pred_fallthru
      _
    // Predicated region
    $region14: #{tpu_custom_call.1} parent=1 // pred_check
      _
    $region15: #{tpu_custom_call.1} parent=1 // pred_check_branch
      %48 = sbr.rel (0) target = $region17
    $region16: #{tpu_custom_call.1} parent=1 // pred_region
      %49 = dma.done [#allocation3], 1024
    $region17: #{tpu_custom_call.1} parent=1 // pred_fallthru
      _
    // Predicated region
    $region18: #{tpu_custom_call.1} parent=1 // pred_check
      _
    $region19: #{tpu_custom_call.1} parent=1 // pred_check_branch
      %51 = sbr.rel (0) target = $region21
    $region20: #{tpu_custom_call.1} parent=1 // pred_region
      %52 = dma.done [#allocation6], 1024
    $region21: #{tpu_custom_call.1} parent=1 // pred_fallthru
      _
    // Predicated region
    $region22: #{tpu_custom_call.1} parent=1 // pred_check
      _
    $region23: #{tpu_custom_call.1} parent=1 // pred_check_branch
      %54 = sbr.rel (0) target = $region25
    $region24: #{tpu_custom_call.1} parent=1 // pred_region
      %55 = dma.done [#allocation6], 1024
    $region25: #{tpu_custom_call.1} parent=1 // pred_fallthru
      _
    %p57 = scmp.eq.s32.totalorder 0, 0
    // Predicated region
    $region26: #{tpu_custom_call.1} parent=1 // pred_check
      %p58 = pneg %p57
    $region27: #{tpu_custom_call.1} parent=1 // pred_check_branch
      %60 = sbr.rel (%p58) target = $region29
    $region28: #{tpu_custom_call.1} parent=1 // pred_region
      %61 = vst [vmem:[#allocation8] sm:$0xff] 0.0
      %62 = vst [vmem:[#allocation8 + $0x8] sm:$0xff] 0.0
      %63 = vst [vmem:[#allocation8 + $0x10] sm:$0xff] 0.0
      %64 = vst [vmem:[#allocation8 + $0x18] sm:$0xff] 0.0
      %65 = vst [vmem:[#allocation8 + $0x20] sm:$0xff] 0.0
      %66 = vst [vmem:[#allocation8 + $0x28] sm:$0xff] 0.0
      %67 = vst [vmem:[#allocation8 + $0x30] sm:$0xff] 0.0
      %68 = vst [vmem:[#allocation8 + $0x38] sm:$0xff] 0.0
      %69 = vst [vmem:[#allocation8 + $0x40] sm:$0xff] 0.0
      %70 = vst [vmem:[#allocation8 + $0x48] sm:$0xff] 0.0
      %71 = vst [vmem:[#allocation8 + $0x50] sm:$0xff] 0.0
      %72 = vst [vmem:[#allocation8 + $0x58] sm:$0xff] 0.0
      %73 = vst [vmem:[#allocation8 + $0x60] sm:$0xff] 0.0
      %74 = vst [vmem:[#allocation8 + $0x68] sm:$0xff] 0.0
      %75 = vst [vmem:[#allocation8 + $0x70] sm:$0xff] 0.0
      %76 = vst [vmem:[#allocation8 + $0x78] sm:$0xff] 0.0
    $region29: #{tpu_custom_call.1} parent=1 // pred_fallthru
      _
    %s77 = smul.u32 0, 128
    %s78 = sshra.s32 %s77, 3
    %s79 = sand.u32 %s77, 7
    %s80 = smul.addr %s78, 4
    %s81 = scalar_lea.vmem [#allocation5], %s80
    %v82 = vld [vmem:[%s81] sm:$0xf]
    %v83 = vld [vmem:[%s81 + $0x4] sm:$0xf]
    %v84 = vld [vmem:[%s81 + $0x8] sm:$0xf]
    %v85 = vld [vmem:[%s81 + $0xc] sm:$0xf]
    %v86 = vld [vmem:[%s81 + $0x10] sm:$0xf]
    %v87 = vld [vmem:[%s81 + $0x14] sm:$0xf]
    %v88 = vld [vmem:[%s81 + $0x18] sm:$0xf]
    %v89 = vld [vmem:[%s81 + $0x1c] sm:$0xf]
    %v90 = vld [vmem:[%s81 + $0x20] sm:$0xf]
    %v91 = vld [vmem:[%s81 + $0x24] sm:$0xf]
    %v92 = vld [vmem:[%s81 + $0x28] sm:$0xf]
    %v93 = vld [vmem:[%s81 + $0x2c] sm:$0xf]
    %v94 = vld [vmem:[%s81 + $0x30] sm:$0xf]
    %v95 = vld [vmem:[%s81 + $0x34] sm:$0xf]
    %v96 = vld [vmem:[%s81 + $0x38] sm:$0xf]
    %v97 = vld [vmem:[%s81 + $0x3c] sm:$0xf]
    %v98 = vld [vmem:[#allocation8] sm:$0xff]
    %v99 = vld [vmem:[#allocation8 + $0x8] sm:$0xff]
    %v100 = vld [vmem:[#allocation8 + $0x10] sm:$0xff]
    %v101 = vld [vmem:[#allocation8 + $0x18] sm:$0xff]
    %v102 = vld [vmem:[#allocation8 + $0x20] sm:$0xff]
    %v103 = vld [vmem:[#allocation8 + $0x28] sm:$0xff]
    %v104 = vld [vmem:[#allocation8 + $0x30] sm:$0xff]
    %v105 = vld [vmem:[#allocation8 + $0x38] sm:$0xff]
    %v106 = vld [vmem:[#allocation8 + $0x40] sm:$0xff]
    %v107 = vld [vmem:[#allocation8 + $0x48] sm:$0xff]
    %v108 = vld [vmem:[#allocation8 + $0x50] sm:$0xff]
    %v109 = vld [vmem:[#allocation8 + $0x58] sm:$0xff]
    %v110 = vld [vmem:[#allocation8 + $0x60] sm:$0xff]
    %v111 = vld [vmem:[#allocation8 + $0x68] sm:$0xff]
    %v112 = vld [vmem:[#allocation8 + $0x70] sm:$0xff]
    %v113 = vld [vmem:[#allocation8 + $0x78] sm:$0xff]
    %v114 = vld [vmem:[#allocation2] sm:$0xf]
    %v115 = vld [vmem:[#allocation2 + $0x4] sm:$0xf]
    %v116 = vld [vmem:[#allocation2 + $0x8] sm:$0xf]
    %v117 = vld [vmem:[#allocation2 + $0xc] sm:$0xf]
    %v118 = vld [vmem:[#allocation2 + $0x10] sm:$0xf]
    %v119 = vld [vmem:[#allocation2 + $0x14] sm:$0xf]
    %v120 = vld [vmem:[#allocation2 + $0x18] sm:$0xf]
    %v121 = vld [vmem:[#allocation2 + $0x1c] sm:$0xf]
    %v122 = vld [vmem:[#allocation2 + $0x20] sm:$0xf]
    %v123 = vld [vmem:[#allocation2 + $0x24] sm:$0xf]
    %v124 = vld [vmem:[#allocation2 + $0x28] sm:$0xf]
    %v125 = vld [vmem:[#allocation2 + $0x2c] sm:$0xf]
    %v126 = vld [vmem:[#allocation2 + $0x30] sm:$0xf]
    %v127 = vld [vmem:[#allocation2 + $0x34] sm:$0xf]
    %v128 = vld [vmem:[#allocation2 + $0x38] sm:$0xf]
    %v129 = vld [vmem:[#allocation2 + $0x3c] sm:$0xf]
    %v146 = vunpack.c.l.b16 %v114
    %v147 = vunpack.c.l.b16 %v115
    %v148 = vunpack.c.l.b16 %v116
    %v149 = vunpack.c.l.b16 %v117
    %v150 = vunpack.c.l.b16 %v118
    %v151 = vunpack.c.l.b16 %v119
    %v152 = vunpack.c.l.b16 %v120
    %v153 = vunpack.c.l.b16 %v121
    %v154 = vunpack.c.l.b16 %v122
    %v155 = vunpack.c.l.b16 %v123
    %v156 = vunpack.c.l.b16 %v124
    %v157 = vunpack.c.l.b16 %v125
    %v158 = vunpack.c.l.b16 %v126
    %v159 = vunpack.c.l.b16 %v127
    %v160 = vunpack.c.l.b16 %v128
    %v161 = vunpack.c.l.b16 %v129
    %v162 = vpack.c.b16 %v147, %v146
    %v163 = vpack.c.b16 %v149, %v148
    %v164 = vpack.c.b16 %v151, %v150
    %v165 = vpack.c.b16 %v153, %v152
    %v166 = vpack.c.b16 %v155, %v154
    %v167 = vpack.c.b16 %v157, %v156
    %v168 = vpack.c.b16 %v159, %v158
    %v169 = vpack.c.b16 %v161, %v160
    %v194 = vunpack.c.l.b16 %v82
    %v195 = vunpack.c.l.b16 %v83
    %v196 = vunpack.c.l.b16 %v84
    %v197 = vunpack.c.l.b16 %v85
    %v198 = vunpack.c.l.b16 %v86
    %v199 = vunpack.c.l.b16 %v87
    %v200 = vunpack.c.l.b16 %v88
    %v201 = vunpack.c.l.b16 %v89
    %v202 = vunpack.c.l.b16 %v90
    %v203 = vunpack.c.l.b16 %v91
    %v204 = vunpack.c.l.b16 %v92
    %v205 = vunpack.c.l.b16 %v93
    %v206 = vunpack.c.l.b16 %v94
    %v207 = vunpack.c.l.b16 %v95
    %v208 = vunpack.c.l.b16 %v96
    %v209 = vunpack.c.l.b16 %v97
    %v210 = vpack.c.b16 %v195, %v194
    %v211 = vpack.c.b16 %v197, %v196
    %v212 = vpack.c.b16 %v199, %v198
    %v213 = vpack.c.b16 %v201, %v200
    %v214 = vpack.c.b16 %v203, %v202
    %v215 = vpack.c.b16 %v205, %v204
    %v216 = vpack.c.b16 %v207, %v206
    %v217 = vpack.c.b16 %v209, %v208
    %226 = vmatprep.subr.bf16.mxu0 0
    %227 = vmatpush1.bf16.msra.mxu0 %v210
    %228 = vmatprep.subr.bf16.mxu0 0
    %229 = vmatpush1.bf16.msra.mxu0 %v211
    %230 = vmatprep.subr.bf16.mxu0 0
    %231 = vmatpush1.bf16.msra.mxu0 %v212
    %232 = vmatprep.subr.bf16.mxu0 0
    %233 = vmatpush1.bf16.msra.mxu0 %v213
    %234 = vmatprep.subr.bf16.mxu0 0
    %235 = vmatpush1.bf16.msra.mxu0 %v214
    %236 = vmatprep.subr.bf16.mxu0 0
    %237 = vmatpush1.bf16.msra.mxu0 %v215
    %238 = vmatprep.subr.bf16.mxu0 0
    %239 = vmatpush1.bf16.msra.mxu0 %v216
    %240 = vmatprep.subr.bf16.mxu0 0
    %241 = vmatpush1.bf16.msra.mxu0 %v217
    %242 = vmatprep.subr.bf16.mxu0 0
    %243 = vmatpush1.bf16.msra.mxu0 0
    %244 = vmatprep.subr.bf16.mxu0 0
    %245 = vmatpush1.bf16.msra.mxu0 0
    %246 = vmatprep.subr.bf16.mxu0 0
    %247 = vmatpush1.bf16.msra.mxu0 0
    %248 = vmatprep.subr.bf16.mxu0 0
    %249 = vmatpush1.bf16.msra.mxu0 0
    %250 = vmatprep.subr.bf16.mxu0 0
    %251 = vmatpush1.bf16.msra.mxu0 0
    %252 = vmatprep.subr.bf16.mxu0 0
    %253 = vmatpush1.bf16.msra.mxu0 0
    %254 = vmatprep.subr.bf16.mxu0 0
    %255 = vmatpush1.bf16.msra.mxu0 0
    %256 = vmatprep.subr.bf16.mxu0 0
    %257 = vmatpush1.bf16.msra.mxu0 0
    %258 = vmatprep.mubr.bf16.mxu0 0
    %259 = vmatmul.mubr.bf16.gmra.mrb[0].mxu0 %v162
    %v260 = vpop.f32.mrb[0].mxu0
    %v261 = vadd.f32 0.0, %v260
    %v262 = vpop.f32.mrb[0].mxu0
    %v263 = vpop.f32.mrb[0].mxu0
    %v264 = vadd.f32 0.0, %v263
    %v265 = vpop.f32.mrb[0].mxu0
    %266 = vmatprep.mubr.bf16.mxu0 0
    %267 = vmatmul.mubr.bf16.gmra.mrb[0].mxu0 %v163
    %v268 = vpop.f32.mrb[0].mxu0
    %v269 = vadd.f32 0.0, %v268
    %v270 = vpop.f32.mrb[0].mxu0
    %v271 = vpop.f32.mrb[0].mxu0
    %v272 = vadd.f32 0.0, %v271
    %v273 = vpop.f32.mrb[0].mxu0
    %274 = vmatprep.mubr.bf16.mxu0 0
    %275 = vmatmul.mubr.bf16.gmra.mrb[0].mxu0 %v164
    %v276 = vpop.f32.mrb[0].mxu0
    %v277 = vadd.f32 0.0, %v276
    %v278 = vpop.f32.mrb[0].mxu0
    %v279 = vpop.f32.mrb[0].mxu0
    %v280 = vadd.f32 0.0, %v279
    %v281 = vpop.f32.mrb[0].mxu0
    %282 = vmatprep.mubr.bf16.mxu0 0
    %283 = vmatmul.mubr.bf16.gmra.mrb[0].mxu0 %v165
    %v284 = vpop.f32.mrb[0].mxu0
    %v285 = vadd.f32 0.0, %v284
    %v286 = vpop.f32.mrb[0].mxu0
    %v287 = vpop.f32.mrb[0].mxu0
    %v288 = vadd.f32 0.0, %v287
    %v289 = vpop.f32.mrb[0].mxu0
    %290 = vmatprep.mubr.bf16.mxu0 0
    %291 = vmatmul.mubr.bf16.gmra.mrb[0].mxu0 %v166
    %v292 = vpop.f32.mrb[0].mxu0
    %v293 = vadd.f32 0.0, %v292
    %v294 = vpop.f32.mrb[0].mxu0
    %v295 = vpop.f32.mrb[0].mxu0
    %v296 = vadd.f32 0.0, %v295
    %v297 = vpop.f32.mrb[0].mxu0
    %298 = vmatprep.mubr.bf16.mxu0 0
    %299 = vmatmul.mubr.bf16.gmra.mrb[0].mxu0 %v167
    %v300 = vpop.f32.mrb[0].mxu0
    %v301 = vadd.f32 0.0, %v300
    %v302 = vpop.f32.mrb[0].mxu0
    %v303 = vpop.f32.mrb[0].mxu0
    %v304 = vadd.f32 0.0, %v303
    %v305 = vpop.f32.mrb[0].mxu0
    %306 = vmatprep.mubr.bf16.mxu0 0
    %307 = vmatmul.mubr.bf16.gmra.mrb[0].mxu0 %v168
    %v308 = vpop.f32.mrb[0].mxu0
    %v309 = vadd.f32 0.0, %v308
    %v310 = vpop.f32.mrb[0].mxu0
    %v311 = vpop.f32.mrb[0].mxu0
    %v312 = vadd.f32 0.0, %v311
    %v313 = vpop.f32.mrb[0].mxu0
    %314 = vmatprep.mubr.bf16.mxu0 0
    %315 = vmatmul.mubr.bf16.gmra.mrb[0].mxu0 %v169
    %v316 = vpop.f32.mrb[0].mxu0
    %v317 = vadd.f32 0.0, %v316
    %v318 = vpop.f32.mrb[0].mxu0
    %v319 = vpop.f32.mrb[0].mxu0
    %v320 = vadd.f32 0.0, %v319
    %v321 = vpop.f32.mrb[0].mxu0
    %322 = vdwg.mxu0
    %v323 = vadd.f32 %v98, %v261
    %v324 = vadd.f32 %v99, %v264
    %v325 = vadd.f32 %v100, %v269
    %v326 = vadd.f32 %v101, %v272
    %v327 = vadd.f32 %v102, %v277
    %v328 = vadd.f32 %v103, %v280
    %v329 = vadd.f32 %v104, %v285
    %v330 = vadd.f32 %v105, %v288
    %v331 = vadd.f32 %v106, %v293
    %v332 = vadd.f32 %v107, %v296
    %v333 = vadd.f32 %v108, %v301
    %v334 = vadd.f32 %v109, %v304
    %v335 = vadd.f32 %v110, %v309
    %v336 = vadd.f32 %v111, %v312
    %v337 = vadd.f32 %v112, %v317
    %v338 = vadd.f32 %v113, %v320
    %339 = vst [vmem:[#allocation8] sm:$0xff] %v323
    %340 = vst [vmem:[#allocation8 + $0x8] sm:$0xff] %v324
    %341 = vst [vmem:[#allocation8 + $0x10] sm:$0xff] %v325
    %342 = vst [vmem:[#allocation8 + $0x18] sm:$0xff] %v326
    %343 = vst [vmem:[#allocation8 + $0x20] sm:$0xff] %v327
    %344 = vst [vmem:[#allocation8 + $0x28] sm:$0xff] %v328
    %345 = vst [vmem:[#allocation8 + $0x30] sm:$0xff] %v329
    %346 = vst [vmem:[#allocation8 + $0x38] sm:$0xff] %v330
    %347 = vst [vmem:[#allocation8 + $0x40] sm:$0xff] %v331
    %348 = vst [vmem:[#allocation8 + $0x48] sm:$0xff] %v332
    %349 = vst [vmem:[#allocation8 + $0x50] sm:$0xff] %v333
    %350 = vst [vmem:[#allocation8 + $0x58] sm:$0xff] %v334
    %351 = vst [vmem:[#allocation8 + $0x60] sm:$0xff] %v335
    %352 = vst [vmem:[#allocation8 + $0x68] sm:$0xff] %v336
    %353 = vst [vmem:[#allocation8 + $0x70] sm:$0xff] %v337
    %354 = vst [vmem:[#allocation8 + $0x78] sm:$0xff] %v338
    // Predicated region
    $region30: #{tpu_custom_call.1} parent=1 // pred_check
      %p355 = pneg %p57
    $region31: #{tpu_custom_call.1} parent=1 // pred_check_branch
      %357 = sbr.rel (%p355) target = $region33
    $region32: #{tpu_custom_call.1} parent=1 // pred_region
      %v358 = vld [vmem:[#allocation8] sm:$0xff]
      %v359 = vld [vmem:[#allocation8 + $0x8] sm:$0xff]
      %v360 = vld [vmem:[#allocation8 + $0x10] sm:$0xff]
      %v361 = vld [vmem:[#allocation8 + $0x18] sm:$0xff]
      %v362 = vld [vmem:[#allocation8 + $0x20] sm:$0xff]
      %v363 = vld [vmem:[#allocation8 + $0x28] sm:$0xff]
      %v364 = vld [vmem:[#allocation8 + $0x30] sm:$0xff]
      %v365 = vld [vmem:[#allocation8 + $0x38] sm:$0xff]
      %v366 = vld [vmem:[#allocation8 + $0x40] sm:$0xff]
      %v367 = vld [vmem:[#allocation8 + $0x48] sm:$0xff]
      %v368 = vld [vmem:[#allocation8 + $0x50] sm:$0xff]
      %v369 = vld [vmem:[#allocation8 + $0x58] sm:$0xff]
      %v370 = vld [vmem:[#allocation8 + $0x60] sm:$0xff]
      %v371 = vld [vmem:[#allocation8 + $0x68] sm:$0xff]
      %v372 = vld [vmem:[#allocation8 + $0x70] sm:$0xff]
      %v373 = vld [vmem:[#allocation8 + $0x78] sm:$0xff]
      %v374 = vld [vmem:[#allocation7] sm:$0xf]
      %v375 = vld [vmem:[#allocation7 + $0x4] sm:$0xf]
      %v376 = vld [vmem:[#allocation7 + $0x8] sm:$0xf]
      %v377 = vld [vmem:[#allocation7 + $0xc] sm:$0xf]
      %v378 = vld [vmem:[#allocation7 + $0x10] sm:$0xf]
      %v379 = vld [vmem:[#allocation7 + $0x14] sm:$0xf]
      %v380 = vld [vmem:[#allocation7 + $0x18] sm:$0xf]
      %v381 = vld [vmem:[#allocation7 + $0x1c] sm:$0xf]
      %v382 = vld [vmem:[#allocation7 + $0x20] sm:$0xf]
      %v383 = vld [vmem:[#allocation7 + $0x24] sm:$0xf]
      %v384 = vld [vmem:[#allocation7 + $0x28] sm:$0xf]
      %v385 = vld [vmem:[#allocation7 + $0x2c] sm:$0xf]
      %v386 = vld [vmem:[#allocation7 + $0x30] sm:$0xf]
      %v387 = vld [vmem:[#allocation7 + $0x34] sm:$0xf]
      %v388 = vld [vmem:[#allocation7 + $0x38] sm:$0xf]
      %v389 = vld [vmem:[#allocation7 + $0x3c] sm:$0xf]
      %v390 = vunpack.c.l.bf16 %v374
      %v391 = vunpack.c.l.bf16 %v375
      %v392 = vunpack.c.l.bf16 %v376
      %v393 = vunpack.c.l.bf16 %v377
      %v394 = vunpack.c.l.bf16 %v378
      %v395 = vunpack.c.l.bf16 %v379
      %v396 = vunpack.c.l.bf16 %v380
      %v397 = vunpack.c.l.bf16 %v381
      %v398 = vunpack.c.l.bf16 %v382
      %v399 = vunpack.c.l.bf16 %v383
      %v400 = vunpack.c.l.bf16 %v384
      %v401 = vunpack.c.l.bf16 %v385
      %v402 = vunpack.c.l.bf16 %v386
      %v403 = vunpack.c.l.bf16 %v387
      %v404 = vunpack.c.l.bf16 %v388
      %v405 = vunpack.c.l.bf16 %v389
      %v406 = vadd.f32 %v358, %v390
      %v407 = vadd.f32 %v359, %v391
      %v408 = vadd.f32 %v360, %v392
      %v409 = vadd.f32 %v361, %v393
      %v410 = vadd.f32 %v362, %v394
      %v411 = vadd.f32 %v363, %v395
      %v412 = vadd.f32 %v364, %v396
      %v413 = vadd.f32 %v365, %v397
      %v414 = vadd.f32 %v366, %v398
      %v415 = vadd.f32 %v367, %v399
      %v416 = vadd.f32 %v368, %v400
      %v417 = vadd.f32 %v369, %v401
      %v418 = vadd.f32 %v370, %v402
      %v419 = vadd.f32 %v371, %v403
      %v420 = vadd.f32 %v372, %v404
      %v421 = vadd.f32 %v373, %v405
      %v422 = vmax.f32 %v406, 0.0
      %v423 = vmax.f32 %v407, 0.0
      %v424 = vmax.f32 %v408, 0.0
      %v425 = vmax.f32 %v409, 0.0
      %v426 = vmax.f32 %v410, 0.0
      %v427 = vmax.f32 %v411, 0.0
      %v428 = vmax.f32 %v412, 0.0
      %v429 = vmax.f32 %v413, 0.0
      %v430 = vmax.f32 %v414, 0.0
      %v431 = vmax.f32 %v415, 0.0
      %v432 = vmax.f32 %v416, 0.0
      %v433 = vmax.f32 %v417, 0.0
      %v434 = vmax.f32 %v418, 0.0
      %v435 = vmax.f32 %v419, 0.0
      %v436 = vmax.f32 %v420, 0.0
      %v437 = vmax.f32 %v421, 0.0
      %438 = vst [vmem:[#allocation8] sm:$0xff] %v422
      %439 = vst [vmem:[#allocation8 + $0x8] sm:$0xff] %v423
      %440 = vst [vmem:[#allocation8 + $0x10] sm:$0xff] %v424
      %441 = vst [vmem:[#allocation8 + $0x18] sm:$0xff] %v425
      %442 = vst [vmem:[#allocation8 + $0x20] sm:$0xff] %v426
      %443 = vst [vmem:[#allocation8 + $0x28] sm:$0xff] %v427
      %444 = vst [vmem:[#allocation8 + $0x30] sm:$0xff] %v428
      %445 = vst [vmem:[#allocation8 + $0x38] sm:$0xff] %v429
      %446 = vst [vmem:[#allocation8 + $0x40] sm:$0xff] %v430
      %447 = vst [vmem:[#allocation8 + $0x48] sm:$0xff] %v431
      %448 = vst [vmem:[#allocation8 + $0x50] sm:$0xff] %v432
      %449 = vst [vmem:[#allocation8 + $0x58] sm:$0xff] %v433
      %450 = vst [vmem:[#allocation8 + $0x60] sm:$0xff] %v434
      %451 = vst [vmem:[#allocation8 + $0x68] sm:$0xff] %v435
      %452 = vst [vmem:[#allocation8 + $0x70] sm:$0xff] %v436
      %453 = vst [vmem:[#allocation8 + $0x78] sm:$0xff] %v437
    $region33: #{tpu_custom_call.1} parent=1 // pred_fallthru
      _
    // Predicated region
    $region34: #{tpu_custom_call.1} parent=1 // pred_check
      _
    $region35: #{tpu_custom_call.1} parent=1 // pred_check_branch
      %455 = sbr.rel (0) target = $region37
    $region36: #{tpu_custom_call.1} parent=1 // pred_region
      %s457 = ssub.s32 2048, 2048
      %458 = vsyncadd [#allocation4], %s457
      %s459 = sshll.u32 [#allocation8], 4
      %s460 = int_to_ptr.vmem [resolvable:$true] %s459
      %465 = dma.vmem_to_hbm [thread:$0]  %s460, 2048, %s3, [#allocation4], 128, 128, 8
    $region37: #{tpu_custom_call.1} parent=1 // pred_fallthru
      _
    // Predicated region
    $region38: #{tpu_custom_call.1} parent=1 // pred_check
      _
    $region39: #{tpu_custom_call.1} parent=1 // pred_check_branch
      %467 = sbr.rel (0) target = $region41
    $region40: #{tpu_custom_call.1} parent=1 // pred_region
      %468 = dma.done [#allocation4], 2048
    $region41: #{tpu_custom_call.1} parent=1 // pred_fallthru
      _
    %469 = vsyncpa [#allocation3], 1
    %470 = vsyncpa [#allocation6], 1
    %471 = vsyncpa [#allocation4], 1

</llo_original>
